<compile_context>
chip_gen: v7x
topology: tpu7x:2x2x1
jax: 0.10.0
libtpu: 0.0.40
codegen_flags: <defaults>
</compile_context>

<pallas_src>
import jax
import jax.numpy as jnp
import numpy as np
from jax.experimental import pallas as pl
from jax.experimental.pallas import tpu as pltpu


def mixer_kernel(x_ref, w_ref, o_ref):
    # x_ref : (TB, C, TS) block of log-probabilities over channels
    # w_ref : (F, C)      prob-domain 1x1 mixing kernel (= exp(log_softmax(kernel)))
    # o_ref : (TB, F, TS) output log-probabilities
    w = w_ref[...]                                                     # (F, C), f32
    for b in range(x_ref.shape[0]):            # short static unroll (TB <= 8)
        e = jnp.exp(x_ref[b].astype(jnp.float32))                      # (C, TS)  EUP
        # logsumexp_c(x_c + lk_fc) = log( sum_c exp(lk_fc) * exp(x_c) )
        p = jnp.dot(w, e, preferred_element_type=jnp.float32)          # (F, TS)  MXU
        o_ref[b] = jnp.log(p).astype(o_ref.dtype)                      # (F, TS)  EUP


def _choose_tiles(B, C, F, S):
    """Pick (TB, TS): batch rows and lane columns per grid step.

    Sublane-aware VMEM accounting, ~24 MiB double-buffered footprint cap (v7x-safe),
    >= ~1 MiB per input tile, and >= 2 grid steps whenever the problem allows it.
    """
    LANE = 128
    c_rows = -(-C // 8) * 8
    f_rows = -(-F // 8) * 8
    bytes_per_col = (c_rows + f_rows) * 4            # f32 in + f32 out, sublane padded
    vmem_cap = 24 * 1024 * 1024                      # 2x(in+out) tiles must fit here
    max_cols = max(LANE, (vmem_cap // (2 * bytes_per_col)) // LANE * LANE)
    target_cols = min(max_cols, max(LANE, (1 << 20) // (c_rows * 4)))  # ~1 MiB input tile

    if S >= target_cols:
        # Spatial axis alone gives big tiles: TB=1, TS = lane-dense multiple of 128,
        # as large as useful; keep several grid steps so the pipeline fills and both
        # v7x TensorCores get work.
        tb = 1
        tiles_wanted = max(2, -(-8 // max(B, 1)))
        ts = min(max_cols, max(target_cols, -(-S // tiles_wanted)))
        ts = max(LANE, (min(ts, S) // LANE) * LANE)
    else:
        # Small images: whole spatial extent per step (block last-dim == full S is
        # legal even when S % 128 != 0); block over batch to bulk up each step.
        ts = S
        tb = max(1, min(B, target_cols // max(S, 1)))
        if tb >= B and B > 1:
            tb = -(-B // 2)        # keep >= 2 grid steps when there is >1 batch row
        tb = min(tb, 8)            # bound the in-kernel unroll
    return tb, ts


def mixer_forward(x_nchw, log_kernel, *, out_dtype=None, tiles=None):
    """x_nchw: (B, C, H, W) log-probs, log_kernel: (F, C). Returns (B, F, H, W)."""
    B, C, H, W = x_nchw.shape
    F = log_kernel.shape[0]
    S = H * W
    out_dtype = np.dtype(x_nchw.dtype if out_dtype is None else out_dtype)

    x = x_nchw.reshape(B, C, S)                          # contiguous -> free reshape
    w = jnp.exp(log_kernel).astype(jnp.float32)          # grid-invariant (F, C)

    if tiles is None:
        TB, TS = _choose_tiles(B, C, F, S)
    else:
        TB, TS = tiles

    grid = (pl.cdiv(B, TB), pl.cdiv(S, TS))

    cost = pl.CostEstimate(
        flops=2 * B * S * F * C,
        transcendentals=B * S * (C + F),
        bytes_accessed=B * S * (C * np.dtype(x.dtype).itemsize
                                + F * out_dtype.itemsize) + F * C * 4,
    )

    out = pl.pallas_call(
        mixer_kernel,
        out_shape=jax.ShapeDtypeStruct((B, F, S), out_dtype),
        grid_spec=pltpu.PrefetchScalarGridSpec(
            num_scalar_prefetch=0,
            grid=grid,
            in_specs=[
                pl.BlockSpec((TB, C, TS), lambda b, s: (b, 0, s)),
                pl.BlockSpec((F, C), lambda b, s: (0, 0)),
            ],
            out_specs=pl.BlockSpec((TB, F, TS), lambda b, s: (b, 0, s)),
        ),
        compiler_params=pltpu.CompilerParams(
            dimension_semantics=("parallel", "parallel"),
            vmem_limit_bytes=32 * 1024 * 1024,
        ),
        cost_estimate=cost,
    )(x, w)

    return out.reshape(B, F, H, W)


def make_log_kernel(key, fnum, icnum, chansz, inp_icnum, ksize=1, coef=10.0):
    """Deterministic stand-in for paraminit (coef=10) + get_log_kernel().
    Raw kernel shape (fnum, icnum, chansz, inp_icnum, ksize, ksize);
    get_log_kernel -> log-softmax over the (chansz, inp_icnum) axes."""
    shape = (fnum, icnum, chansz, inp_icnum, ksize, ksize)
    raw = coef * jax.random.uniform(key, shape, dtype=jnp.float32)
    k = raw.reshape(fnum * icnum, chansz * inp_icnum, ksize, ksize)
    lk = jax.nn.log_softmax(k, axis=1)
    return lk[:, :, 0, 0]  # (F, C) since kernel is 1x1 spatially


if __name__ == "__main__":
    # Small shapes consistent with the module: fnum=8, inp_chan_sz=4, kersize=1,
    # icnum=inp_icnum=1, isbiased=False.
    B, C, H, W = 2, 4, 16, 16
    F = 8

    key = jax.random.PRNGKey(0)
    kx, kw = jax.random.split(key)

    # Input: log-probabilities over the channel axis (as expected by KL layers).
    logits = jax.random.normal(kx, (B, C, H, W), dtype=jnp.float32)
    x = jax.nn.log_softmax(logits, axis=1)

    lk = make_log_kernel(kw, fnum=F, icnum=1, chansz=C, inp_icnum=1, ksize=1, coef=10.0)

    y = jax.block_until_ready(mixer_forward(x, lk))

    # Pure-JAX reference: y[b,f,h,w] = logsumexp_c(x[b,c,h,w] + lk[f,c])
    y_ref = jax.nn.logsumexp(x[:, None, :, :, :] + lk[None, :, :, None, None], axis=2)
    assert y.shape == (B, F, H, W)
    assert jnp.allclose(y, y_ref, atol=1e-5, rtol=1e-5), "mismatch vs reference"

    # Non-128-multiple spatial extent (S=196) and an odd batch (B=3): exercises the
    # partial trailing *batch* block, with no wrapper pad/slice anywhere.
    B2, H2, W2 = 3, 14, 14
    logits2 = jax.random.normal(jax.random.PRNGKey(1), (B2, C, H2, W2), dtype=jnp.float32)
    x2 = jax.nn.log_softmax(logits2, axis=1)
    y2 = jax.block_until_ready(mixer_forward(x2, lk))
    y2_ref = jax.nn.logsumexp(x2[:, None, :, :, :] + lk[None, :, :, None, None], axis=2)
    assert jnp.allclose(y2, y2_ref, atol=1e-5, rtol=1e-5), "mismatch vs reference (odd B)"

    # Force the lane-tiled path with a partial trailing *spatial* block (TS=128 over
    # S=196) to validate that dropping the wrapper pad/slice is safe.
    y3 = jax.block_until_ready(mixer_forward(x2, lk, tiles=(1, 128)))
    assert jnp.allclose(y3, y2_ref, atol=1e-5, rtol=1e-5), "mismatch vs reference (partial tile)"

    # TODO(synk): isstoch=True (LogSumExpStoch sampling path), the non-conv branch,
    # and isbiased=True are not exercised by the default forward and not implemented.
    print("KERNEL_OK")
</pallas_src>

<mosaic_0001>
module attributes {stable_mosaic.version = 11 : i64} {
  func.func @mixer_kernel(%arg0: i32, %arg1: i32, %arg2: memref<1x4x256xf32, #tpu.memory_space<vmem>>, %arg3: memref<8x4xf32, #tpu.memory_space<vmem>>, %arg4: memref<1x8x256xf32, #tpu.memory_space<vmem>>) attributes {dimension_semantics = [#tpu.dimension_semantics<parallel>, #tpu.dimension_semantics<parallel>], iteration_bounds = array<i64: 2, 1>, scalar_prefetch = 0 : i64, scratch_operands = 0 : i64, tpu.core_type = #tpu.core_type<tc>, window_params = [{transform_indices = @transform_0, window_bounds = array<i64: 1, 4, 256>}, {pipeline_mode = #tpu.pipeline_mode<synchronous>, transform_indices = @transform_1, window_bounds = array<i64: 8, 4>}, {transform_indices = @transform_2, window_bounds = array<i64: 1, 8, 256>}]} {
    %c0 = arith.constant 0 : index
    %c0_0 = arith.constant 0 : index
    %0 = vector.load %arg3[%c0, %c0_0] : memref<8x4xf32, #tpu.memory_space<vmem>>, vector<8x4xf32>
    %c0_1 = arith.constant 0 : index
    %c0_2 = arith.constant 0 : index
    %c0_3 = arith.constant 0 : index
    %1 = vector.load %arg2[%c0_1, %c0_2, %c0_3] : memref<1x4x256xf32, #tpu.memory_space<vmem>>, vector<1x4x256xf32>
    %2 = vector.shape_cast %1 : vector<1x4x256xf32> to vector<4x256xf32>
    %3 = math.exp %2 : vector<4x256xf32>
    %cst = arith.constant dense<0.000000e+00> : vector<8x256xf32>
    %4 = tpu.matmul %0, %3, %cst {dimension_numbers = #tpu.dot_dimension_numbers<[1], [0], [0], [1], [0, 0, 1, 1], [], []>} : vector<8x4xf32>, vector<4x256xf32>, vector<8x256xf32> -> vector<8x256xf32>
    %5 = math.log %4 : vector<8x256xf32>
    %c0_4 = arith.constant 0 : index
    %c0_5 = arith.constant 0 : index
    %c0_6 = arith.constant 0 : index
    %6 = vector.load %arg4[%c0_4, %c0_5, %c0_6] : memref<1x8x256xf32, #tpu.memory_space<vmem>>, vector<1x8x256xf32>
    %7 = vector.shape_cast %6 : vector<1x8x256xf32> to vector<8x256xf32>
    %8 = vector.shape_cast %5 : vector<8x256xf32> to vector<1x8x256xf32>
    tpu.vector_store %arg4[%c0_4, %c0_5, %c0_6], %8 {strides = array<i32>} : memref<1x8x256xf32, #tpu.memory_space<vmem>>, vector<1x8x256xf32>,
    return
  }
  func.func @transform_0(%arg0: i32, %arg1: i32) -> (i32, i32, i32) {
    %c0_i32 = arith.constant 0 : i32
    %c0_i32_0 = arith.constant 0 : i32
    return %arg0, %c0_i32, %arg1 : i32, i32, i32
  }
  func.func @transform_1(%arg0: i32, %arg1: i32) -> (i32, i32) {
    %c0_i32 = arith.constant 0 : i32
    %c0_i32_0 = arith.constant 0 : i32
    %c0_i32_1 = arith.constant 0 : i32
    return %c0_i32, %c0_i32_0 : i32, i32
  }
  func.func @transform_2(%arg0: i32, %arg1: i32) -> (i32, i32, i32) {
    %c0_i32 = arith.constant 0 : i32
    %c0_i32_0 = arith.constant 0 : i32
    return %arg0, %c0_i32, %arg1 : i32, i32, i32
  }
}

</mosaic_0001>

<llo_original>
// kernel: tpu_custom_call.1
$region0: #{tpu_custom_call.1}
  #allocation0 [shape = 'u32[]', space=smem, size = 0x4, offset = 0x4, fixed_abs, tag = 'smem constant byte address 0x4 - core index']
  #allocation1 [shape = 'u32[144,128]{1,0:T(1,128)}', space=vmem, size = 0x12000, scoped, tag = 'internal scratch']
  %s0 = inlined_call_operand.hbm [shape: f32[2,4,256], index: 0, kind: input, shape index: {}]
  %s1 = inlined_call_operand.vmem [shape: f32[8,4], index: 1, kind: input, shape index: {}]
  %s2 = inlined_call_operand.hbm [shape: f32[2,8,256], index: 2, kind: output, shape index: {}]
  %s3 = sld [smem:[#allocation0]]
  $region45: #{tpu_custom_call.1} parent=0
    _
  %s5 = ssub.s32 1, %s3
  %s6 = scalar_select 0, %s5, %s3
  $region1: #{tpu_custom_call.1} parent=0
    #allocation2 [shape = 'u8[8192]{0}', space=vmem, size = 0x2000, scoped, tag = 'input window, operand 0']
    #allocation3 [shape = 's32[2]{0}', space=sflag, size = 0x8, scoped, tag = 'scoped memory for tpu_custom_call.1']
    #allocation4 [shape = 's32[2]{0}', space=sflag, size = 0x8, scoped, tag = 'scoped memory for tpu_custom_call.1']
    #allocation5 [shape = 'u8[16384]{0}', space=vmem, size = 0x4000, scoped, tag = 'output window, operand 0']
    %7 = vsyncpa [#allocation3], 0
    %s8 = scalar_lea.sflag [#allocation3], 1
    %9 = vsyncpa %s8, 0
    %10 = vsyncpa [#allocation4], 0
    %s11 = scalar_lea.sflag [#allocation4], 1
    %12 = vsyncpa %s11, 0
    loop: start=0, step=1, limit=4
    $region2: #{tpu_custom_call.1} parent=1 // loop_pre_header
      _
    $region3: #{tpu_custom_call.1} parent=1 // loop_header
      %s14 = sphi 0, %s18
      %p15 = scmp.ge.s32.totalorder %s14, 4
      %s21 = sphi 0, %s33
      %s22 = sphi 0, %s29
      %s23 = sphi 0, %s21
      %s24 = sphi 0, %s22
      %s25 = sphi 0, %s23
      %s26 = sphi 0, %s24
      %s38 = sphi 0, %s40
      %s41 = sphi 0, %s38
      %s42 = sphi 0, %s41
      %s58 = sphi 0, %s42
      %s62 = sphi 0, %s62
      %s64 = sphi 0, %s62
      %s65 = sphi 0, %s64
      %s79 = sphi 0, %s65
      %s87 = sphi 0, %s89
      %s90 = sphi 0, %s87
      %s91 = sphi 0, %s90
      %s107 = sphi 0, %s91
    $region4: #{tpu_custom_call.1} parent=1 // loop_header_branch
      %17 = sbr.rel (%p15) target = $region8
    $region5: #{tpu_custom_call.1} parent=1 // loop_body
      %s19 = ssub.s32 %s14, 1
      %s20 = ssub.s32 %s14, 2
      %s27 = sadd.s32 1, %s22
      %p28 = scmp.ge.s32.totalorder %s27, 1
      %s29 = scalar_select %p28, 0, %s27
      %s30 = sadd.s32 1, %s21
      %s31 = scalar_select %p28, %s30, %s21
      %p32 = scmp.ge.s32.totalorder %s31, 2
      %s33 = scalar_select %p32, 0, %s31
      %s34 = ssub.s32 %s21, %s33
      %s35 = ssub.s32 %s22, %s29
      %s36 = sor.u32 %s34, %s35
      %p37 = scmp.eq.s32.totalorder %s36, 0
      %s39 = sadd.s32 %s38, 1
      %s40 = scalar_select %p37, %s38, %s39
      %p43 = pneg %p37
      %p44 = scmp.eq.s32.totalorder %s14, 1
      %p45 = por %p43, %p44
      %p46 = scmp.ne.s32.totalorder %s38, %s41
      %p47 = scmp.eq.s32.totalorder %s14, 0
      %p48 = por %p46, %p47
      %p49 = scmp.ne.s32.totalorder %s38, %s41
      %p50 = scmp.eq.s32.totalorder %s19, 1
      %p51 = por %p49, %p50
      %p52 = scmp.ne.s32.totalorder %s41, %s42
      %p53 = scmp.eq.s32.totalorder %s19, 0
      %p54 = por %p52, %p53
      %p55 = scmp.ne.s32.totalorder %s41, %s42
      %p56 = scmp.eq.s32.totalorder %s20, 1
      %p57 = por %p55, %p56
      %p59 = scmp.ne.s32.totalorder %s42, %s58
      %p60 = scmp.eq.s32.totalorder %s20, 0
      %p61 = por %p59, %p60
      %s63 = sadd.s32 %s62, 1
      %p66 = scmp.eq.s32.totalorder %s14, 1
      %p67 = scmp.ne.s32.totalorder %s62, %s64
      %p68 = scmp.eq.s32.totalorder %s14, 0
      %p69 = por %p67, %p68
      %p70 = scmp.ne.s32.totalorder %s62, %s64
      %p71 = scmp.eq.s32.totalorder %s19, 1
      %p72 = por %p70, %p71
      %p73 = scmp.ne.s32.totalorder %s64, %s65
      %p74 = scmp.eq.s32.totalorder %s19, 0
      %p75 = por %p73, %p74
      %p76 = scmp.ne.s32.totalorder %s64, %s65
      %p77 = scmp.eq.s32.totalorder %s20, 1
      %p78 = por %p76, %p77
      %p80 = scmp.ne.s32.totalorder %s65, %s79
      %p81 = scmp.eq.s32.totalorder %s20, 0
      %p82 = por %p80, %p81
      %s83 = ssub.s32 %s21, %s33
      %s84 = ssub.s32 %s22, %s29
      %s85 = sor.u32 %s83, %s84
      %p86 = scmp.eq.s32.totalorder %s85, 0
      %s88 = sadd.s32 %s87, 1
      %s89 = scalar_select %p86, %s87, %s88
      %p92 = pneg %p86
      %p93 = scmp.eq.s32.totalorder %s14, 1
      %p94 = por %p92, %p93
      %p95 = scmp.ne.s32.totalorder %s87, %s90
      %p96 = scmp.eq.s32.totalorder %s14, 0
      %p97 = por %p95, %p96
      %p98 = scmp.ne.s32.totalorder %s87, %s90
      %p99 = scmp.eq.s32.totalorder %s19, 1
      %p100 = por %p98, %p99
      %p101 = scmp.ne.s32.totalorder %s90, %s91
      %p102 = scmp.eq.s32.totalorder %s19, 0
      %p103 = por %p101, %p102
      %p104 = scmp.ne.s32.totalorder %s90, %s91
      %p105 = scmp.eq.s32.totalorder %s20, 1
      %p106 = por %p104, %p105
      %p108 = scmp.ne.s32.totalorder %s91, %s107
      %p109 = scmp.eq.s32.totalorder %s20, 0
      %p110 = por %p108, %p109
      %p111 = scmp.le.s32.totalorder 1, %s14
      %p112 = scmp.lt.s32.totalorder %s14, 3
      %p113 = pnand %p111, %p112
      %p114 = pneg %p113
      // Predicated region
      $region9: #{tpu_custom_call.1} parent=5 // pred_check
        _
      $region10: #{tpu_custom_call.1} parent=5 // pred_check_branch
        %116 = sbr.rel (%p113) target = $region12
      $region11: #{tpu_custom_call.1} parent=5 // pred_region
        %s117 = ssub.s32 %s14, 1
        // Predicated region
        $region13: #{tpu_custom_call.1} parent=11 // pred_check
          %p118 = pneg %p75
        $region14: #{tpu_custom_call.1} parent=11 // pred_check_branch
          %120 = sbr.rel (%p118) target = $region16
        $region15: #{tpu_custom_call.1} parent=11 // pred_region
          _
        $region16: #{tpu_custom_call.1} parent=11 // pred_fallthru
          _
      $region12: #{tpu_custom_call.1} parent=5 // pred_fallthru
        _
      %p121 = scmp.lt.s32.totalorder %s14, 2
      // Predicated region
      $region17: #{tpu_custom_call.1} parent=5 // pred_check
        %p122 = pneg %p121
      $region18: #{tpu_custom_call.1} parent=5 // pred_check_branch
        %124 = sbr.rel (%p122) target = $region20
      $region19: #{tpu_custom_call.1} parent=5 // pred_region
        // Predicated region
        $region21: #{tpu_custom_call.1} parent=19 // pred_check
          %p125 = pneg %p48
        $region22: #{tpu_custom_call.1} parent=19 // pred_check_branch
          %127 = sbr.rel (%p125) target = $region24
        $region23: #{tpu_custom_call.1} parent=19 // pred_region
          %s128 = sand.u32 %s38, 1
          %s129 = scalar_lea.sflag [#allocation3], %s128
          %s130 = sand.u32 %s38, 1
          %s131 = smul.addr %s130, 8
          %s132 = scalar_lea.vmem [#allocation2], %s131
          %s133 = smul.u32 2, %s22
          %s135 = ssub.s32 128, 128
          %136 = vsyncadd %s129, %s135
          %s137 = smul.addr %s21, 2
          %s138 = sadd.s32 %s133, %s137
          %s139 = smul.addr %s138, 64
          %s140 = scalar_lea.hbm %s0, %s139
          %s142 = sshll.u32 %s132, 4
          %s143 = int_to_ptr.vmem [resolvable:$true] %s142
          %145 = dma.hbm_to_vmem [thread:$0]  %s140, 128, %s143, %s129
        $region24: #{tpu_custom_call.1} parent=19 // pred_fallthru
          _
      $region20: #{tpu_custom_call.1} parent=5 // pred_fallthru
        _
      %p146 = scmp.le.s32.totalorder 1, %s14
      %p147 = scmp.lt.s32.totalorder %s14, 3
      %p148 = pnand %p146, %p147
      %p149 = pneg %p148
      // Predicated region
      $region25: #{tpu_custom_call.1} parent=5 // pred_check
        _
      $region26: #{tpu_custom_call.1} parent=5 // pred_check_branch
        %151 = sbr.rel (%p148) target = $region28
      $region27: #{tpu_custom_call.1} parent=5 // pred_region
        %s152 = ssub.s32 %s14, 1
        %s153 = sand.u32 %s41, 1
        %s154 = scalar_lea.sflag [#allocation3], %s153
        %s155 = sand.u32 %s41, 1
        %s156 = smul.addr %s155, 8
        %s157 = scalar_lea.vmem [#allocation2], %s156
        // Predicated region
        $region29: #{tpu_custom_call.1} parent=27 // pred_check
          %p158 = pneg %p54
        $region30: #{tpu_custom_call.1} parent=27 // pred_check_branch
          %160 = sbr.rel (%p158) target = $region32
        $region31: #{tpu_custom_call.1} parent=27 // pred_region
          %161 = dma.done %s154, 128
        $region32: #{tpu_custom_call.1} parent=27 // pred_fallthru
          _
        %s162 = sand.u32 %s41, 1
        %s163 = scalar_lea.sflag [#allocation3], %s162
        %s164 = sand.u32 %s41, 1
        %s165 = smul.addr %s164, 8
        %s166 = scalar_lea.vmem [#allocation2], %s165
        %p167 = pneg %p54
        %p168 = pneg %p51
        %p169 = pneg %p75
        %p170 = pneg %p72
        %p171 = pneg %p103
        %p172 = pneg %p100
        %s173 = sand.u32 %s90, 1
        %s174 = scalar_lea.sflag [#allocation4], %s173
        %s175 = sand.u32 %s90, 1
        %s176 = smul.addr %s175, 16
        %s177 = scalar_lea.vmem [#allocation5], %s176
        %s178 = smul.u32 2, %s24
        %s179 = smul.u32 2, %s24
        %v180 = vld [vmem:[%s1] sm:$0xff]
        %v181 = vld [vmem:[%s157] sm:$0xff]
        %v182 = vmul.f32 %v181, 1.442695
        %v183 = vpow.pop %v182
        %v185 = vcombine.high %v183, %v183
        %vm186 = vcmask 31744
        %v188 = vsel %vm186, %v180, 0
        %vm190 = vcmask 1043456
        %v191 = vsel %vm190, %v183, 0
        %v193 = vsel %vm190, %v185, 0
        %195 = vmatprep.subr.mxu0 %v193
        %196 = vmatpush1.msra.mxu0 %v191
        %197 = vmatprep.subr.mxu0 0.0
        %198 = vmatpush1.msra.mxu0 0.0
        %199 = vmatprep.subr.mxu0 0.0
        %200 = vmatpush1.msra.mxu0 0.0
        %201 = vmatprep.subr.mxu0 0.0
        %202 = vmatpush1.msra.mxu0 0.0
        %203 = vmatprep.subr.mxu0 0.0
        %204 = vmatpush1.msra.mxu0 0.0
        %205 = vmatprep.subr.mxu0 0.0
        %206 = vmatpush1.msra.mxu0 0.0
        %207 = vmatprep.subr.mxu0 0.0
        %208 = vmatpush1.msra.mxu0 0.0
        %209 = vmatprep.subr.mxu0 0.0
        %210 = vmatpush1.msra.mxu0 0.0
        %211 = vmatprep.subr.mxu0 0.0
        %212 = vmatpush1.msra.mxu0 0.0
        %213 = vmatprep.subr.mxu0 0.0
        %214 = vmatpush1.msra.mxu0 0.0
        %215 = vmatprep.subr.mxu0 0.0
        %216 = vmatpush1.msra.mxu0 0.0
        %217 = vmatprep.subr.mxu0 0.0
        %218 = vmatpush1.msra.mxu0 0.0
        %219 = vmatprep.subr.mxu0 0.0
        %220 = vmatpush1.msra.mxu0 0.0
        %221 = vmatprep.subr.mxu0 0.0
        %222 = vmatpush1.msra.mxu0 0.0
        %223 = vmatprep.subr.mxu0 0.0
        %224 = vmatpush1.msra.mxu0 0.0
        %225 = vmatprep.subr.mxu0 0.0
        %226 = vmatpush1.msra.mxu0 0.0
        %227 = vmatprep.subr.mxu0 0.0
        %228 = vmatpush1.msra.mxu0 0.0
        %229 = vmatprep.subr.mxu0 0.0
        %230 = vmatpush1.msra.mxu0 0.0
        %231 = vmatprep.subr.mxu0 0.0
        %232 = vmatpush1.msra.mxu0 0.0
        %233 = vmatprep.subr.mxu0 0.0
        %234 = vmatpush1.msra.mxu0 0.0
        %235 = vmatprep.subr.mxu0 0.0
        %236 = vmatpush1.msra.mxu0 0.0
        %237 = vmatprep.subr.mxu0 0.0
        %238 = vmatpush1.msra.mxu0 0.0
        %239 = vmatprep.subr.mxu0 0.0
        %240 = vmatpush1.msra.mxu0 0.0
        %241 = vmatprep.subr.mxu0 0.0
        %242 = vmatpush1.msra.mxu0 0.0
        %243 = vmatprep.subr.mxu0 0.0
        %244 = vmatpush1.msra.mxu0 0.0
        %245 = vmatprep.subr.mxu0 0.0
        %246 = vmatpush1.msra.mxu0 0.0
        %247 = vmatprep.subr.mxu0 0.0
        %248 = vmatpush1.msra.mxu0 0.0
        %249 = vmatprep.subr.mxu0 0.0
        %250 = vmatpush1.msra.mxu0 0.0
        %251 = vmatprep.subr.mxu0 0.0
        %252 = vmatpush1.msra.mxu0 0.0
        %253 = vmatprep.subr.mxu0 0.0
        %254 = vmatpush1.msra.mxu0 0.0
        %255 = vmatprep.subr.mxu0 0.0
        %256 = vmatpush1.msra.mxu0 0.0
        %257 = vmatprep.subr.mxu0 0.0
        %258 = vmatpush1.msra.mxu0 0.0
        %259 = vmatprep.mubr.f32.mxu0 0.0
        %260 = vmatmul.mubr.f32.gmra.mrb[0].mxu0 %v188
        %v261 = vpop.f32.mrb[0].mxu0
        %v262 = vadd.f32 0.0, %v261
        %v263 = vpop.f32.mrb[0].mxu0
        %v264 = vadd.f32 0.0, %v263
        %265 = vdwg.mxu0
        %v266 = vlog2.pop %v262
        %v267 = vmul.f32 %v266, 0.6931472
        %v268 = vlog2.pop %v264
        %v269 = vmul.f32 %v268, 0.6931472
        %270 = vst [vmem:[%s177] sm:$0xff] %v267
        %271 = vst [vmem:[%s177 + $0x8] sm:$0xff] %v269
        %s272 = sand.u32 %s90, 1
        %s273 = scalar_lea.sflag [#allocation4], %s272
        %s274 = sand.u32 %s90, 1
        %s275 = smul.addr %s274, 16
        %s276 = scalar_lea.vmem [#allocation5], %s275
        // Predicated region
        $region33: #{tpu_custom_call.1} parent=27 // pred_check
          %p277 = pneg %p100
        $region34: #{tpu_custom_call.1} parent=27 // pred_check_branch
          %279 = sbr.rel (%p277) target = $region36
        $region35: #{tpu_custom_call.1} parent=27 // pred_region
          %s280 = smul.u32 2, %s24
          %s282 = ssub.s32 256, 256
          %283 = vsyncadd %s273, %s282
          %s284 = smul.addr %s23, 2
          %s285 = sadd.s32 %s280, %s284
          %s286 = smul.addr %s285, 128
          %s287 = scalar_lea.hbm %s2, %s286
          %s289 = sshll.u32 %s276, 4
          %s290 = int_to_ptr.vmem [resolvable:$true] %s289
          %292 = dma.vmem_to_hbm [thread:$0]  %s290, 256, %s287, %s273
        $region36: #{tpu_custom_call.1} parent=27 // pred_fallthru
          _
      $region28: #{tpu_custom_call.1} parent=5 // pred_fallthru
        _
      %p293 = scmp.le.s32.totalorder 2, %s14
      // Predicated region
      $region37: #{tpu_custom_call.1} parent=5 // pred_check
        %p294 = pneg %p293
      $region38: #{tpu_custom_call.1} parent=5 // pred_check_branch
        %296 = sbr.rel (%p294) target = $region40
      $region39: #{tpu_custom_call.1} parent=5 // pred_region
        %s297 = ssub.s32 %s14, 2
        // Predicated region
        $region41: #{tpu_custom_call.1} parent=39 // pred_check
          %p298 = pneg %p106
        $region42: #{tpu_custom_call.1} parent=39 // pred_check_branch
          %300 = sbr.rel (%p298) target = $region44
        $region43: #{tpu_custom_call.1} parent=39 // pred_region
          %s301 = sand.u32 %s91, 1
          %s302 = scalar_lea.sflag [#allocation4], %s301
          %s303 = sand.u32 %s91, 1
          %s304 = smul.addr %s303, 16
          %s305 = scalar_lea.vmem [#allocation5], %s304
          %306 = dma.done %s302, 256
        $region44: #{tpu_custom_call.1} parent=39 // pred_fallthru
          _
      $region40: #{tpu_custom_call.1} parent=5 // pred_fallthru
        _
    $region6: #{tpu_custom_call.1} parent=1 // loop_footer
      %s18 = sadd.s32 1, %s14
    $region7: #{tpu_custom_call.1} parent=1 // loop_footer_branch
      %13 = sbr.rel target = $region3
    $region8: #{tpu_custom_call.1} parent=1 // loop_exit
      _
    %307 = vsyncpa [#allocation3], 1
    %s308 = scalar_lea.sflag [#allocation3], 1
    %309 = vsyncpa %s308, 1
    %310 = vsyncpa [#allocation4], 1
    %s311 = scalar_lea.sflag [#allocation4], 1
    %312 = vsyncpa %s311, 1

</llo_original>
